<compile_context>
chip_gen: v7x
topology: tpu7x:2x2x1
jax: 0.10.0
libtpu: 0.0.40
codegen_flags: <defaults>
</compile_context>

<pallas_src>
import jax
import jax.numpy as jnp
from jax.experimental import pallas as pl
from jax.experimental.pallas import tpu as pltpu


def _gru_chunk_kernel(gi_ref,      # (C, 3H) f32 precomputed input projection chunk
                      h0_ref,      # (1, H)  initial hidden state
                      whh_t_ref,   # (H, 3H) W_hh^T (f32 or bf16), gates [r|z|n]
                      bhn_ref,     # (1, H)  b_hh for the n gate
                      out_ref,     # (C, H)  per-step GRU outputs for this chunk
                      h_scratch):  # VMEM (1, H) f32: hidden carried across chunks
    C = gi_ref.shape[0]
    H = h0_ref.shape[1]

    # Load the initial hidden state into the carried scratch on the first chunk.
    @pl.when(pl.program_id(0) == 0)
    def _():
        h_scratch[...] = h0_ref[...].astype(jnp.float32)

    whh = whh_t_ref[...]                      # VMEM-resident across all chunks
    bhn = bhn_ref[...].astype(jnp.float32)    # (1, H)
    gi_blk = gi_ref[...].astype(jnp.float32)  # (C, 3H) single dense load

    h = h_scratch[...]                        # (1, H) f32
    rows = []
    # Small static trip count -> plain unrolled Python loop (static slices are
    # free; keeps every per-step load/store at a compile-time offset).
    for i in range(C):
        gi = gi_blk[i:i + 1, :]                                    # (1, 3H)
        # Serial MXU matmul: hidden projection only (input proj. was hoisted).
        gh = jnp.dot(h.astype(whh.dtype), whh,
                     preferred_element_type=jnp.float32)           # (1, 3H)

        # Gate slices land on 128-lane boundaries when H % 128 == 0.
        i_r, i_z, i_n = gi[:, 0:H], gi[:, H:2 * H], gi[:, 2 * H:3 * H]
        h_r, h_z, h_n = gh[:, 0:H], gh[:, H:2 * H], gh[:, 2 * H:3 * H]

        # b_ih and b_hh[r], b_hh[z] are already folded into gi; b_hh[n] must
        # stay inside r*(...) to match PyTorch GRU semantics.
        r = jax.nn.sigmoid(i_r + h_r)
        z = jax.nn.sigmoid(i_z + h_z)
        n = jnp.tanh(i_n + r * (h_n + bhn))
        h = (1.0 - z) * n + z * h                                  # (1, H)
        rows.append(h)

    h_scratch[...] = h                                             # carry
    # One dense (C, H) store per chunk (full vreg at C=8, H=128).
    out_ref[...] = jnp.concatenate(rows, axis=0).astype(out_ref.dtype)


def prepare_params(params, whh_dtype=jnp.float32):
    """One-time parameter prep: transposes, bias folding, optional bf16 weights."""
    H = params["embedding"].shape[1]
    b_ih = params["b_ih"]
    b_hh = params["b_hh"]
    # Fold b_ih (all gates) + b_hh for the r/z gates into the precomputed gi.
    bias_fold = b_ih + jnp.concatenate(
        [b_hh[0:H], b_hh[H:2 * H], jnp.zeros((H,), b_hh.dtype)])
    return {
        "embedding": params["embedding"],                     # (V, H) f32
        "w_ih_t": params["w_ih"].T,                           # (H, 3H) f32
        "w_hh_t": params["w_hh"].T.astype(whh_dtype),         # (H, 3H)
        "bias_fold": bias_fold.reshape(1, 3 * H),             # (1, 3H) f32
        "b_hh_n": b_hh[2 * H:3 * H].reshape(1, H),            # (1, H)  f32
    }


def encoder_rnn_forward_seq(token_ids, hidden, prepped, chunk=8):
    """Run the encoder GRU over a whole token sequence in ONE pallas_call.

    token_ids : (T,) int32
    hidden    : (1, 1, H) float32 initial hidden
    returns   : outputs (T, 1, H), final hidden (1, 1, H)
    """
    emb = prepped["embedding"]          # (V, H)
    w_ih_t = prepped["w_ih_t"]          # (H, 3H)
    w_hh_t = prepped["w_hh_t"]          # (H, 3H)
    bias_fold = prepped["bias_fold"]    # (1, 3H)
    b_hh_n = prepped["b_hh_n"]          # (1, H)

    H = emb.shape[1]
    T = int(token_ids.shape[0])
    tok = jnp.asarray(token_ids, jnp.int32).reshape(T)
    h0 = hidden.reshape(1, H).astype(jnp.float32)

    # --- Hoisted input projection: one batched gather + (T,H)@(H,3H) matmul ---
    x_all = jnp.take(emb, tok, axis=0)                               # (T, H)
    gi_all = jnp.dot(x_all, w_ih_t,
                     preferred_element_type=jnp.float32) + bias_fold  # (T, 3H)

    # --- Chunk the time axis; pad to a whole number of chunks -----------------
    C = int(min(chunk, T))
    if T > C and C % 8 != 0:
        raise ValueError("chunk must be a multiple of 8 when T > chunk")
    n_chunks = pl.cdiv(T, C)
    T_pad = n_chunks * C
    if T_pad != T:
        # Padded steps compute garbage rows that are sliced off below; they do
        # not feed back into any real output row.
        gi_all = jnp.pad(gi_all, ((0, T_pad - T), (0, 0)))

    grid_spec = pltpu.PrefetchScalarGridSpec(
        num_scalar_prefetch=0,
        grid=(n_chunks,),
        in_specs=[
            pl.BlockSpec((C, 3 * H), lambda c: (c, 0)),   # gi chunk (pipelined)
            pl.BlockSpec((1, H), lambda c: (0, 0)),       # initial hidden
            pl.BlockSpec((H, 3 * H), lambda c: (0, 0)),   # W_hh^T (VMEM-resident)
            pl.BlockSpec((1, H), lambda c: (0, 0)),       # b_hh (n gate)
        ],
        out_specs=pl.BlockSpec((C, H), lambda c: (c, 0)),
        scratch_shapes=[pltpu.VMEM((1, H), jnp.float32)],  # carried hidden state
    )

    outputs = pl.pallas_call(
        _gru_chunk_kernel,
        out_shape=jax.ShapeDtypeStruct((T_pad, H), jnp.float32),
        grid_spec=grid_spec,
        compiler_params=pltpu.CompilerParams(
            # True sequential dependence across chunks (scratch-carried hidden).
            dimension_semantics=("arbitrary",),
            vmem_limit_bytes=32 * 1024 * 1024),
    )(gi_all, h0, w_hh_t, b_hh_n)

    outputs = outputs[:T]                                  # drop padding rows
    hidden_new = outputs[T - 1].reshape(1, 1, H)
    return outputs.reshape(T, 1, H), hidden_new


def encoder_rnn_forward(token_id, hidden, prepped):
    """Exact mirror of EncoderRNN.forward: one token -> (output, hidden)."""
    tok = jnp.asarray(token_id, jnp.int32).reshape(1)
    outputs, hidden_new = encoder_rnn_forward_seq(tok, hidden, prepped, chunk=1)
    return outputs.reshape(1, 1, -1), hidden_new


# ----------------------------- pure-JAX reference -----------------------------

def _gru_cell_ref(x, h, params):
    H = h.shape[-1]
    gi = x @ params["w_ih"].T + params["b_ih"]
    gh = h @ params["w_hh"].T + params["b_hh"]
    i_r, i_z, i_n = gi[:, :H], gi[:, H:2 * H], gi[:, 2 * H:]
    h_r, h_z, h_n = gh[:, :H], gh[:, H:2 * H], gh[:, 2 * H:]
    r = jax.nn.sigmoid(i_r + h_r)
    z = jax.nn.sigmoid(i_z + h_z)
    n = jnp.tanh(i_n + r * h_n)
    return (1.0 - z) * n + z * h


def _reference_forward_seq(token_ids, hidden, params):
    H = hidden.shape[-1]
    h = hidden.reshape(1, H)
    outs = []
    for tok in token_ids:
        x = params["embedding"][tok].reshape(1, H)
        h = _gru_cell_ref(x, h, params)
        outs.append(h)
    return jnp.stack(outs, axis=0), h.reshape(1, 1, H)    # (T,1,H), (1,1,H)


def init_params(key, input_size, hidden_size):
    """Deterministic parameter init (shapes match nn.Embedding + nn.GRU)."""
    k_emb, k_wih, k_whh, k_bih, k_bhh = jax.random.split(key, 5)
    bound = 1.0 / jnp.sqrt(hidden_size)
    return {
        "embedding": jax.random.normal(k_emb, (input_size, hidden_size),
                                       jnp.float32),
        "w_ih": jax.random.uniform(k_wih, (3 * hidden_size, hidden_size),
                                   jnp.float32, -bound, bound),
        "w_hh": jax.random.uniform(k_whh, (3 * hidden_size, hidden_size),
                                   jnp.float32, -bound, bound),
        "b_ih": jax.random.uniform(k_bih, (3 * hidden_size,),
                                   jnp.float32, -bound, bound),
        "b_hh": jax.random.uniform(k_bhh, (3 * hidden_size,),
                                   jnp.float32, -bound, bound),
    }


if __name__ == "__main__":
    vocab_size = 64
    hidden_size = 128       # multiple of 128 -> lane-aligned gate slices
    seq_len = 12            # not a multiple of chunk -> exercises padding path
    chunk = 8               # tokens per grid step (multiple of 8 for sublanes)

    key = jax.random.PRNGKey(0)
    params = init_params(key, vocab_size, hidden_size)
    prepped_f32 = prepare_params(params)                          # exact semantics
    prepped_bf16 = prepare_params(params, whh_dtype=jnp.bfloat16)  # perf variant

    token_ids = jax.random.randint(jax.random.fold_in(key, 123),
                                   (seq_len,), 0, vocab_size, dtype=jnp.int32)
    hidden0 = jnp.zeros((1, 1, hidden_size), jnp.float32)   # initHidden()

    # Single-step call (exact EncoderRNN.forward semantics).
    out1, hid1 = encoder_rnn_forward(token_ids[0], hidden0, prepped_f32)
    out1 = jax.block_until_ready(out1)
    hid1 = jax.block_until_ready(hid1)

    # Full sequence, chunked time grid, one kernel launch.
    outs, hid_final = encoder_rnn_forward_seq(token_ids, hidden0, prepped_f32,
                                              chunk=chunk)
    outs = jax.block_until_ready(outs)
    hid_final = jax.block_until_ready(hid_final)

    # bf16-weight perf variant (f32 accumulate, f32 gate math).
    outs_bf, hid_bf = encoder_rnn_forward_seq(token_ids, hidden0, prepped_bf16,
                                              chunk=chunk)
    outs_bf = jax.block_until_ready(outs_bf)

    # References.
    ref_outs, ref_hid_final = _reference_forward_seq(token_ids, hidden0, params)
    ref_out1 = ref_outs[0].reshape(1, 1, hidden_size)

    assert out1.shape == (1, 1, hidden_size)
    assert hid1.shape == (1, 1, hidden_size)
    assert outs.shape == (seq_len, 1, hidden_size)
    assert hid_final.shape == (1, 1, hidden_size)
    assert jnp.allclose(out1, ref_out1, atol=1e-4, rtol=1e-4)
    assert jnp.allclose(hid1, ref_out1, atol=1e-4, rtol=1e-4)
    assert jnp.allclose(outs, ref_outs, atol=1e-4, rtol=1e-4)
    assert jnp.allclose(hid_final, ref_hid_final, atol=1e-4, rtol=1e-4)
    # bf16 weights: looser tolerance vs. the f32 reference.
    assert jnp.allclose(outs_bf, ref_outs, atol=3e-2, rtol=3e-2)
    assert jnp.allclose(hid_bf, ref_hid_final, atol=3e-2, rtol=3e-2)

    print("KERNEL_OK")
</pallas_src>

<mosaic_0001>
module attributes {stable_mosaic.version = 11 : i64} {
  func.func @_gru_chunk_kernel(%arg0: i32, %arg1: memref<1x384xf32, #tpu.memory_space<vmem>>, %arg2: memref<1x128xf32, #tpu.memory_space<vmem>>, %arg3: memref<128x384xf32, #tpu.memory_space<vmem>>, %arg4: memref<1x128xf32, #tpu.memory_space<vmem>>, %arg5: memref<1x128xf32, #tpu.memory_space<vmem>>, %arg6: memref<1x128xf32, #tpu.memory_space<vmem>>) attributes {dimension_semantics = [#tpu.dimension_semantics<arbitrary>], iteration_bounds = array<i64: 1>, scalar_prefetch = 0 : i64, scratch_operands = 1 : i64, tpu.core_type = #tpu.core_type<tc>, window_params = [{transform_indices = @transform_0, window_bounds = array<i64: 1, 384>}, {pipeline_mode = #tpu.pipeline_mode<synchronous>, transform_indices = @transform_1, window_bounds = array<i64: 1, 128>}, {pipeline_mode = #tpu.pipeline_mode<synchronous>, transform_indices = @transform_2, window_bounds = array<i64: 128, 384>}, {pipeline_mode = #tpu.pipeline_mode<synchronous>, transform_indices = @transform_3, window_bounds = array<i64: 1, 128>}, {transform_indices = @transform_4, window_bounds = array<i64: 1, 128>}]} {
    %c0_i32 = arith.constant 0 : i32
    %0 = arith.cmpi eq, %arg0, %c0_i32 : i32
    %1 = arith.extui %0 : i1 to i32
    %c0_i32_0 = arith.constant 0 : i32
    %2 = arith.cmpi ne, %1, %c0_i32_0 : i32
    scf.if %2 {
      %c0_15 = arith.constant 0 : index
      %c0_16 = arith.constant 0 : index
      %37 = vector.load %arg2[%c0_15, %c0_16] : memref<1x128xf32, #tpu.memory_space<vmem>>, vector<1x128xf32>
      %c0_17 = arith.constant 0 : index
      %c0_18 = arith.constant 0 : index
      %38 = vector.load %arg6[%c0_17, %c0_18] : memref<1x128xf32, #tpu.memory_space<vmem>>, vector<1x128xf32>
      tpu.vector_store %arg6[%c0_17, %c0_18], %37 {strides = array<i32>} : memref<1x128xf32, #tpu.memory_space<vmem>>, vector<1x128xf32>,
    } else {
    }
    %c0 = arith.constant 0 : index
    %c0_1 = arith.constant 0 : index
    %3 = vector.load %arg3[%c0, %c0_1] : memref<128x384xf32, #tpu.memory_space<vmem>>, vector<128x384xf32>
    %c0_2 = arith.constant 0 : index
    %c0_3 = arith.constant 0 : index
    %4 = vector.load %arg4[%c0_2, %c0_3] : memref<1x128xf32, #tpu.memory_space<vmem>>, vector<1x128xf32>
    %c0_4 = arith.constant 0 : index
    %c0_5 = arith.constant 0 : index
    %5 = vector.load %arg1[%c0_4, %c0_5] : memref<1x384xf32, #tpu.memory_space<vmem>>, vector<1x384xf32>
    %c0_6 = arith.constant 0 : index
    %c0_7 = arith.constant 0 : index
    %6 = vector.load %arg6[%c0_6, %c0_7] : memref<1x128xf32, #tpu.memory_space<vmem>>, vector<1x128xf32>
    %cst = arith.constant dense<0.000000e+00> : vector<1x384xf32>
    %7 = tpu.matmul %6, %3, %cst {dimension_numbers = #tpu.dot_dimension_numbers<[1], [0], [0], [1], [0, 0, 1, 1], [], []>} : vector<1x128xf32>, vector<128x384xf32>, vector<1x384xf32> -> vector<1x384xf32>
    %8 = vector.extract_strided_slice %5 {offsets = [0, 0], sizes = [1, 128], strides = [1, 1]} : vector<1x384xf32> to vector<1x128xf32>
    %9 = vector.extract_strided_slice %5 {offsets = [0, 128], sizes = [1, 128], strides = [1, 1]} : vector<1x384xf32> to vector<1x128xf32>
    %10 = vector.extract_strided_slice %5 {offsets = [0, 256], sizes = [1, 128], strides = [1, 1]} : vector<1x384xf32> to vector<1x128xf32>
    %11 = vector.extract_strided_slice %7 {offsets = [0, 0], sizes = [1, 128], strides = [1, 1]} : vector<1x384xf32> to vector<1x128xf32>
    %12 = vector.extract_strided_slice %7 {offsets = [0, 128], sizes = [1, 128], strides = [1, 1]} : vector<1x384xf32> to vector<1x128xf32>
    %13 = vector.extract_strided_slice %7 {offsets = [0, 256], sizes = [1, 128], strides = [1, 1]} : vector<1x384xf32> to vector<1x128xf32>
    %14 = arith.addf %8, %11 : vector<1x128xf32>
    %15 = arith.negf %14 : vector<1x128xf32>
    %16 = math.exp %15 : vector<1x128xf32>
    %cst_8 = arith.constant 1.000000e+00 : f32
    %17 = vector.broadcast %cst_8 : f32 to vector<1x128xf32>
    %18 = arith.addf %17, %16 : vector<1x128xf32>
    %19 = arith.divf %17, %18 : vector<1x128xf32>
    %20 = arith.addf %9, %12 : vector<1x128xf32>
    %21 = arith.negf %20 : vector<1x128xf32>
    %22 = math.exp %21 : vector<1x128xf32>
    %cst_9 = arith.constant 1.000000e+00 : f32
    %23 = vector.broadcast %cst_9 : f32 to vector<1x128xf32>
    %24 = arith.addf %23, %22 : vector<1x128xf32>
    %25 = arith.divf %23, %24 : vector<1x128xf32>
    %26 = arith.addf %13, %4 : vector<1x128xf32>
    %27 = arith.mulf %19, %26 : vector<1x128xf32>
    %28 = arith.addf %10, %27 : vector<1x128xf32>
    %29 = math.tanh %28 : vector<1x128xf32>
    %cst_10 = arith.constant 1.000000e+00 : f32
    %30 = vector.broadcast %cst_10 : f32 to vector<1x128xf32>
    %31 = arith.subf %30, %25 : vector<1x128xf32>
    %32 = arith.mulf %31, %29 : vector<1x128xf32>
    %33 = arith.mulf %25, %6 : vector<1x128xf32>
    %34 = arith.addf %32, %33 : vector<1x128xf32>
    %c0_11 = arith.constant 0 : index
    %c0_12 = arith.constant 0 : index
    %35 = vector.load %arg6[%c0_11, %c0_12] : memref<1x128xf32, #tpu.memory_space<vmem>>, vector<1x128xf32>
    tpu.vector_store %arg6[%c0_11, %c0_12], %34 {strides = array<i32>} : memref<1x128xf32, #tpu.memory_space<vmem>>, vector<1x128xf32>,
    %c0_13 = arith.constant 0 : index
    %c0_14 = arith.constant 0 : index
    %36 = vector.load %arg5[%c0_13, %c0_14] : memref<1x128xf32, #tpu.memory_space<vmem>>, vector<1x128xf32>
    tpu.vector_store %arg5[%c0_13, %c0_14], %34 {strides = array<i32>} : memref<1x128xf32, #tpu.memory_space<vmem>>, vector<1x128xf32>,
    return
  }
  func.func @transform_0(%arg0: i32) -> (i32, i32) {
    %c0_i32 = arith.constant 0 : i32
    %c0_i32_0 = arith.constant 0 : i32
    return %arg0, %c0_i32 : i32, i32
  }
  func.func @transform_1(%arg0: i32) -> (i32, i32) {
    %c0_i32 = arith.constant 0 : i32
    %c0_i32_0 = arith.constant 0 : i32
    %c0_i32_1 = arith.constant 0 : i32
    return %c0_i32, %c0_i32_0 : i32, i32
  }
  func.func @transform_2(%arg0: i32) -> (i32, i32) {
    %c0_i32 = arith.constant 0 : i32
    %c0_i32_0 = arith.constant 0 : i32
    %c0_i32_1 = arith.constant 0 : i32
    return %c0_i32, %c0_i32_0 : i32, i32
  }
  func.func @transform_3(%arg0: i32) -> (i32, i32) {
    %c0_i32 = arith.constant 0 : i32
    %c0_i32_0 = arith.constant 0 : i32
    %c0_i32_1 = arith.constant 0 : i32
    return %c0_i32, %c0_i32_0 : i32, i32
  }
  func.func @transform_4(%arg0: i32) -> (i32, i32) {
    %c0_i32 = arith.constant 0 : i32
    %c0_i32_0 = arith.constant 0 : i32
    return %arg0, %c0_i32 : i32, i32
  }
}

</mosaic_0001>

<llo_original>
// kernel: tpu_custom_call.1
$region0: #{tpu_custom_call.1}
  #allocation0 [shape = 'u32[]', space=smem, size = 0x4, offset = 0x4, fixed_abs, tag = 'smem constant byte address 0x4 - core index']
  #allocation1 [shape = 'u32[144,128]{1,0:T(1,128)}', space=vmem, size = 0x12000, scoped, tag = 'internal scratch']
  #allocation2 [shape = 'f32[1,128]{1,0:T(1,128)}', space=vmem, size = 0x200, scoped, tag = 'scratch operand']
  %s0 = inlined_call_operand.hbm [shape: f32[1,384], index: 0, kind: input, shape index: {}]
  %s1 = inlined_call_operand.vmem [shape: f32[1,128], index: 1, kind: input, shape index: {}]
  %s2 = inlined_call_operand.hbm [shape: f32[128,384], index: 2, kind: input, shape index: {}]
  %s3 = inlined_call_operand.vmem [shape: f32[1,128], index: 3, kind: input, shape index: {}]
  %s4 = inlined_call_operand.hbm [shape: f32[1,128], index: 4, kind: output, shape index: {}]
  %s5 = sld [smem:[#allocation0]]
  $region38: #{tpu_custom_call.1} parent=0
    _
  %s7 = ssub.s32 1, %s5
  %s8 = scalar_select 0, %s7, %s5
  $region1: #{tpu_custom_call.1} parent=0
    #allocation3 [shape = 'u8[1536]{0}', space=vmem, size = 0x800, scoped, tag = 'input window, operand 0, single buffered']
    #allocation4 [shape = 's32[1]{0}', space=sflag, size = 0x4, scoped, tag = 'scoped memory for tpu_custom_call.1']
    #allocation5 [shape = 's32[1]{0}', space=sflag, size = 0x4, scoped, tag = 'scoped memory for tpu_custom_call.1']
    #allocation6 [shape = 'u8[196608]{0}', space=vmem, size = 0x30000, scoped, tag = 'input window, operand 2, single buffered']
    #allocation7 [shape = 's32[1]{0}', space=sflag, size = 0x4, scoped, tag = 'scoped memory for tpu_custom_call.1']
    #allocation8 [shape = 'u8[512]{0}', space=vmem, size = 0x400, scoped, tag = 'output window, operand 0, single buffered']
    %9 = vsyncpa [#allocation4], 0
    %10 = vsyncpa [#allocation7], 0
    %11 = vsyncpa [#allocation5], 0
    // Predicated region
    $region2: #{tpu_custom_call.1} parent=1 // pred_check
      _
    $region3: #{tpu_custom_call.1} parent=1 // pred_check_branch
      %13 = sbr.rel (0) target = $region5
    $region4: #{tpu_custom_call.1} parent=1 // pred_region
      %s15 = ssub.s32 48, 48
      %16 = vsyncadd [#allocation4], %s15
      %s18 = sshll.u32 [#allocation3], 4
      %s19 = int_to_ptr.vmem [resolvable:$true] %s18
      %21 = dma.hbm_to_vmem [thread:$0]  %s0, 48, %s19, [#allocation4]
    $region5: #{tpu_custom_call.1} parent=1 // pred_fallthru
      _
    // Predicated region
    $region6: #{tpu_custom_call.1} parent=1 // pred_check
      _
    $region7: #{tpu_custom_call.1} parent=1 // pred_check_branch
      %23 = sbr.rel (0) target = $region9
    $region8: #{tpu_custom_call.1} parent=1 // pred_region
      _
    $region9: #{tpu_custom_call.1} parent=1 // pred_fallthru
      _
    // Predicated region
    $region10: #{tpu_custom_call.1} parent=1 // pred_check
      _
    $region11: #{tpu_custom_call.1} parent=1 // pred_check_branch
      %25 = sbr.rel (0) target = $region13
    $region12: #{tpu_custom_call.1} parent=1 // pred_region
      %s27 = ssub.s32 6144, 6144
      %28 = vsyncadd [#allocation7], %s27
      %s29 = sshll.u32 [#allocation6], 4
      %s30 = int_to_ptr.vmem [resolvable:$true] %s29
      %35 = dma.hbm_to_vmem [thread:$0]  %s2, 6144, %s30, [#allocation7], 384, 384, 24
    $region13: #{tpu_custom_call.1} parent=1 // pred_fallthru
      _
    // Predicated region
    $region14: #{tpu_custom_call.1} parent=1 // pred_check
      _
    $region15: #{tpu_custom_call.1} parent=1 // pred_check_branch
      %37 = sbr.rel (0) target = $region17
    $region16: #{tpu_custom_call.1} parent=1 // pred_region
      _
    $region17: #{tpu_custom_call.1} parent=1 // pred_fallthru
      _
    // Predicated region
    $region18: #{tpu_custom_call.1} parent=1 // pred_check
      _
    $region19: #{tpu_custom_call.1} parent=1 // pred_check_branch
      %39 = sbr.rel (0) target = $region21
    $region20: #{tpu_custom_call.1} parent=1 // pred_region
      %40 = dma.done [#allocation4], 48
    $region21: #{tpu_custom_call.1} parent=1 // pred_fallthru
      _
    // Predicated region
    $region22: #{tpu_custom_call.1} parent=1 // pred_check
      _
    $region23: #{tpu_custom_call.1} parent=1 // pred_check_branch
      %42 = sbr.rel (0) target = $region25
    $region24: #{tpu_custom_call.1} parent=1 // pred_region
      %43 = dma.done [#allocation7], 6144
    $region25: #{tpu_custom_call.1} parent=1 // pred_fallthru
      _
    %p44 = scmp.eq.s32.totalorder 0, 0
    // Predicated region
    $region26: #{tpu_custom_call.1} parent=1 // pred_check
      %p45 = pneg %p44
    $region27: #{tpu_custom_call.1} parent=1 // pred_check_branch
      %47 = sbr.rel (%p45) target = $region29
    $region28: #{tpu_custom_call.1} parent=1 // pred_region
      %v48 = vld [vmem:[%s1] sm:$0x1]
      %49 = vst [vmem:[#allocation2] sm:$0x1] %v48
    $region29: #{tpu_custom_call.1} parent=1 // pred_fallthru
      _
    %v50 = vld [vmem:[#allocation6] sm:$0xff]
    %v51 = vld [vmem:[#allocation6 + $0x8] sm:$0xff]
    %v52 = vld [vmem:[#allocation6 + $0x10] sm:$0xff]
    %v53 = vld [vmem:[#allocation6 + $0x18] sm:$0xff]
    %v54 = vld [vmem:[#allocation6 + $0x20] sm:$0xff]
    %v55 = vld [vmem:[#allocation6 + $0x28] sm:$0xff]
    %v56 = vld [vmem:[#allocation6 + $0x30] sm:$0xff]
    %v57 = vld [vmem:[#allocation6 + $0x38] sm:$0xff]
    %v58 = vld [vmem:[#allocation6 + $0x40] sm:$0xff]
    %v59 = vld [vmem:[#allocation6 + $0x48] sm:$0xff]
    %v60 = vld [vmem:[#allocation6 + $0x50] sm:$0xff]
    %v61 = vld [vmem:[#allocation6 + $0x58] sm:$0xff]
    %v62 = vld [vmem:[#allocation6 + $0x60] sm:$0xff]
    %v63 = vld [vmem:[#allocation6 + $0x68] sm:$0xff]
    %v64 = vld [vmem:[#allocation6 + $0x70] sm:$0xff]
    %v65 = vld [vmem:[#allocation6 + $0x78] sm:$0xff]
    %v66 = vld [vmem:[#allocation6 + $0x80] sm:$0xff]
    %v67 = vld [vmem:[#allocation6 + $0x88] sm:$0xff]
    %v68 = vld [vmem:[#allocation6 + $0x90] sm:$0xff]
    %v69 = vld [vmem:[#allocation6 + $0x98] sm:$0xff]
    %v70 = vld [vmem:[#allocation6 + $0xa0] sm:$0xff]
    %v71 = vld [vmem:[#allocation6 + $0xa8] sm:$0xff]
    %v72 = vld [vmem:[#allocation6 + $0xb0] sm:$0xff]
    %v73 = vld [vmem:[#allocation6 + $0xb8] sm:$0xff]
    %v74 = vld [vmem:[#allocation6 + $0xc0] sm:$0xff]
    %v75 = vld [vmem:[#allocation6 + $0xc8] sm:$0xff]
    %v76 = vld [vmem:[#allocation6 + $0xd0] sm:$0xff]
    %v77 = vld [vmem:[#allocation6 + $0xd8] sm:$0xff]
    %v78 = vld [vmem:[#allocation6 + $0xe0] sm:$0xff]
    %v79 = vld [vmem:[#allocation6 + $0xe8] sm:$0xff]
    %v80 = vld [vmem:[#allocation6 + $0xf0] sm:$0xff]
    %v81 = vld [vmem:[#allocation6 + $0xf8] sm:$0xff]
    %v82 = vld [vmem:[#allocation6 + $0x100] sm:$0xff]
    %v83 = vld [vmem:[#allocation6 + $0x108] sm:$0xff]
    %v84 = vld [vmem:[#allocation6 + $0x110] sm:$0xff]
    %v85 = vld [vmem:[#allocation6 + $0x118] sm:$0xff]
    %v86 = vld [vmem:[#allocation6 + $0x120] sm:$0xff]
    %v87 = vld [vmem:[#allocation6 + $0x128] sm:$0xff]
    %v88 = vld [vmem:[#allocation6 + $0x130] sm:$0xff]
    %v89 = vld [vmem:[#allocation6 + $0x138] sm:$0xff]
    %v90 = vld [vmem:[#allocation6 + $0x140] sm:$0xff]
    %v91 = vld [vmem:[#allocation6 + $0x148] sm:$0xff]
    %v92 = vld [vmem:[#allocation6 + $0x150] sm:$0xff]
    %v93 = vld [vmem:[#allocation6 + $0x158] sm:$0xff]
    %v94 = vld [vmem:[#allocation6 + $0x160] sm:$0xff]
    %v95 = vld [vmem:[#allocation6 + $0x168] sm:$0xff]
    %v96 = vld [vmem:[#allocation6 + $0x170] sm:$0xff]
    %v97 = vld [vmem:[#allocation6 + $0x178] sm:$0xff]
    %v98 = vld [vmem:[%s3] sm:$0x1]
    %v99 = vld [vmem:[#allocation3] sm:$0x7]
    %v100 = vld [vmem:[#allocation2] sm:$0x1]
    %101 = vmatprep.subr.mxu0 %v51
    %102 = vmatpush1.msra.mxu0 %v50
    %103 = vmatprep.subr.mxu0 %v54
    %104 = vmatpush1.msra.mxu0 %v53
    %105 = vmatprep.subr.mxu0 %v57
    %106 = vmatpush1.msra.mxu0 %v56
    %107 = vmatprep.subr.mxu0 %v60
    %108 = vmatpush1.msra.mxu0 %v59
    %109 = vmatprep.subr.mxu0 %v63
    %110 = vmatpush1.msra.mxu0 %v62
    %111 = vmatprep.subr.mxu0 %v66
    %112 = vmatpush1.msra.mxu0 %v65
    %113 = vmatprep.subr.mxu0 %v69
    %114 = vmatpush1.msra.mxu0 %v68
    %115 = vmatprep.subr.mxu0 %v72
    %116 = vmatpush1.msra.mxu0 %v71
    %117 = vmatprep.subr.mxu0 %v75
    %118 = vmatpush1.msra.mxu0 %v74
    %119 = vmatprep.subr.mxu0 %v78
    %120 = vmatpush1.msra.mxu0 %v77
    %121 = vmatprep.subr.mxu0 %v81
    %122 = vmatpush1.msra.mxu0 %v80
    %123 = vmatprep.subr.mxu0 %v84
    %124 = vmatpush1.msra.mxu0 %v83
    %125 = vmatprep.subr.mxu0 %v87
    %126 = vmatpush1.msra.mxu0 %v86
    %127 = vmatprep.subr.mxu0 %v90
    %128 = vmatpush1.msra.mxu0 %v89
    %129 = vmatprep.subr.mxu0 %v93
    %130 = vmatpush1.msra.mxu0 %v92
    %131 = vmatprep.subr.mxu0 %v96
    %132 = vmatpush1.msra.mxu0 %v95
    %133 = vmatprep.subr.mxu0 0.0
    %134 = vmatpush1.msra.mxu0 0.0
    %135 = vmatprep.subr.mxu0 0.0
    %136 = vmatpush1.msra.mxu0 0.0
    %137 = vmatprep.subr.mxu0 0.0
    %138 = vmatpush1.msra.mxu0 0.0
    %139 = vmatprep.subr.mxu0 0.0
    %140 = vmatpush1.msra.mxu0 0.0
    %141 = vmatprep.subr.mxu0 0.0
    %142 = vmatpush1.msra.mxu0 0.0
    %143 = vmatprep.subr.mxu0 0.0
    %144 = vmatpush1.msra.mxu0 0.0
    %145 = vmatprep.subr.mxu0 0.0
    %146 = vmatpush1.msra.mxu0 0.0
    %147 = vmatprep.subr.mxu0 0.0
    %148 = vmatpush1.msra.mxu0 0.0
    %149 = vmatprep.subr.mxu0 0.0
    %150 = vmatpush1.msra.mxu0 0.0
    %151 = vmatprep.subr.mxu0 0.0
    %152 = vmatpush1.msra.mxu0 0.0
    %153 = vmatprep.subr.mxu0 0.0
    %154 = vmatpush1.msra.mxu0 0.0
    %155 = vmatprep.subr.mxu0 0.0
    %156 = vmatpush1.msra.mxu0 0.0
    %157 = vmatprep.subr.mxu0 0.0
    %158 = vmatpush1.msra.mxu0 0.0
    %159 = vmatprep.subr.mxu0 0.0
    %160 = vmatpush1.msra.mxu0 0.0
    %161 = vmatprep.subr.mxu0 0.0
    %162 = vmatpush1.msra.mxu0 0.0
    %163 = vmatprep.subr.mxu0 0.0
    %164 = vmatpush1.msra.mxu0 0.0
    %165 = vmatprep.mubr.f32.mxu0 0.0
    %166 = vmatmul.mubr.f32.gmra.mrb[0].mxu0 %v100
    %v167 = vpop.f32.mrb[0].mxu0
    %v168 = vadd.f32 0.0, %v167
    %v169 = vpop.f32.mrb[0].mxu0
    %v170 = vadd.f32 0.0, %v169
    %171 = vdwg.mxu0
    %172 = vmatprep.subr.mxu0 0.0
    %173 = vmatpush1.msra.mxu0 %v52
    %174 = vmatprep.subr.mxu0 0.0
    %175 = vmatpush1.msra.mxu0 %v55
    %176 = vmatprep.subr.mxu0 0.0
    %177 = vmatpush1.msra.mxu0 %v58
    %178 = vmatprep.subr.mxu0 0.0
    %179 = vmatpush1.msra.mxu0 %v61
    %180 = vmatprep.subr.mxu0 0.0
    %181 = vmatpush1.msra.mxu0 %v64
    %182 = vmatprep.subr.mxu0 0.0
    %183 = vmatpush1.msra.mxu0 %v67
    %184 = vmatprep.subr.mxu0 0.0
    %185 = vmatpush1.msra.mxu0 %v70
    %186 = vmatprep.subr.mxu0 0.0
    %187 = vmatpush1.msra.mxu0 %v73
    %188 = vmatprep.subr.mxu0 0.0
    %189 = vmatpush1.msra.mxu0 %v76
    %190 = vmatprep.subr.mxu0 0.0
    %191 = vmatpush1.msra.mxu0 %v79
    %192 = vmatprep.subr.mxu0 0.0
    %193 = vmatpush1.msra.mxu0 %v82
    %194 = vmatprep.subr.mxu0 0.0
    %195 = vmatpush1.msra.mxu0 %v85
    %196 = vmatprep.subr.mxu0 0.0
    %197 = vmatpush1.msra.mxu0 %v88
    %198 = vmatprep.subr.mxu0 0.0
    %199 = vmatpush1.msra.mxu0 %v91
    %200 = vmatprep.subr.mxu0 0.0
    %201 = vmatpush1.msra.mxu0 %v94
    %202 = vmatprep.subr.mxu0 0.0
    %203 = vmatpush1.msra.mxu0 %v97
    %204 = vmatprep.subr.mxu0 0.0
    %205 = vmatpush1.msra.mxu0 0.0
    %206 = vmatprep.subr.mxu0 0.0
    %207 = vmatpush1.msra.mxu0 0.0
    %208 = vmatprep.subr.mxu0 0.0
    %209 = vmatpush1.msra.mxu0 0.0
    %210 = vmatprep.subr.mxu0 0.0
    %211 = vmatpush1.msra.mxu0 0.0
    %212 = vmatprep.subr.mxu0 0.0
    %213 = vmatpush1.msra.mxu0 0.0
    %214 = vmatprep.subr.mxu0 0.0
    %215 = vmatpush1.msra.mxu0 0.0
    %216 = vmatprep.subr.mxu0 0.0
    %217 = vmatpush1.msra.mxu0 0.0
    %218 = vmatprep.subr.mxu0 0.0
    %219 = vmatpush1.msra.mxu0 0.0
    %220 = vmatprep.subr.mxu0 0.0
    %221 = vmatpush1.msra.mxu0 0.0
    %222 = vmatprep.subr.mxu0 0.0
    %223 = vmatpush1.msra.mxu0 0.0
    %224 = vmatprep.subr.mxu0 0.0
    %225 = vmatpush1.msra.mxu0 0.0
    %226 = vmatprep.subr.mxu0 0.0
    %227 = vmatpush1.msra.mxu0 0.0
    %228 = vmatprep.subr.mxu0 0.0
    %229 = vmatpush1.msra.mxu0 0.0
    %230 = vmatprep.subr.mxu0 0.0
    %231 = vmatpush1.msra.mxu0 0.0
    %232 = vmatprep.subr.mxu0 0.0
    %233 = vmatpush1.msra.mxu0 0.0
    %234 = vmatprep.subr.mxu0 0.0
    %235 = vmatpush1.msra.mxu0 0.0
    %236 = vmatprep.mubr.f32.mxu0 0.0
    %237 = vmatmul.mubr.f32.gmra.mrb[0].mxu0 %v100
    %v238 = vpop.f32.mrb[0].mxu0
    %v239 = vadd.f32 0.0, %v238
    %v240 = vpop.f32.mrb[0].mxu0
    %241 = vdwg.mxu0
    %v242 = vadd.f32 %v99, %v168
    %v243 = vxor.u32 %v242, 2147483648
    %v244 = vmul.f32 %v243, 1.442695
    %v245 = vpow.pop %v244
    %v246 = vadd.f32 %v245, 1.0
    %v247 = vrcp.pop %v246
    %v248 = vmul.f32 1.0, %v247
    %v250 = vrot.slane %v99, 1
    %v252 = vadd.f32 %v250, %v170
    %v253 = vxor.u32 %v252, 2147483648
    %v254 = vmul.f32 %v253, 1.442695
    %v255 = vpow.pop %v254
    %v256 = vadd.f32 %v255, 1.0
    %v257 = vrcp.pop %v256
    %v258 = vmul.f32 1.0, %v257
    %v259 = vadd.f32 %v239, %v98
    %v260 = vmul.f32 %v248, %v259
    %v261 = vrot.slane %v99, 2
    %v263 = vadd.f32 %v261, %v260
    %v264 = vtanh.pop %v263
    %v265 = vsub.f32 1.0, %v258
    %v266 = vmul.f32 %v265, %v264
    %v267 = vmul.f32 %v258, %v100
    %v268 = vadd.f32 %v266, %v267
    %269 = vst [vmem:[#allocation2] sm:$0x1] %v268
    %270 = vst [vmem:[#allocation8] sm:$0x1] %v268
    // Predicated region
    $region30: #{tpu_custom_call.1} parent=1 // pred_check
      _
    $region31: #{tpu_custom_call.1} parent=1 // pred_check_branch
      %272 = sbr.rel (0) target = $region33
    $region32: #{tpu_custom_call.1} parent=1 // pred_region
      %s274 = ssub.s32 16, 16
      %275 = vsyncadd [#allocation5], %s274
      %s277 = sshll.u32 [#allocation8], 4
      %s278 = int_to_ptr.vmem [resolvable:$true] %s277
      %280 = dma.vmem_to_hbm [thread:$0]  %s278, 16, %s4, [#allocation5]
    $region33: #{tpu_custom_call.1} parent=1 // pred_fallthru
      _
    // Predicated region
    $region34: #{tpu_custom_call.1} parent=1 // pred_check
      _
    $region35: #{tpu_custom_call.1} parent=1 // pred_check_branch
      %282 = sbr.rel (0) target = $region37
    $region36: #{tpu_custom_call.1} parent=1 // pred_region
      %283 = dma.done [#allocation5], 16
    $region37: #{tpu_custom_call.1} parent=1 // pred_fallthru
      _
    %284 = vsyncpa [#allocation4], 1
    %285 = vsyncpa [#allocation7], 1
    %286 = vsyncpa [#allocation5], 1

</llo_original>
